<compile_context>
chip_gen: v7x
topology: tpu7x:2x2x1
jax: 0.10.0
libtpu: 0.0.40
codegen_flags: <defaults>
</compile_context>

<pallas_src>
import functools

import jax
import jax.numpy as jnp
from jax.experimental import pallas as pl
from jax.experimental.pallas import tpu as pltpu

HID_SIZE = 128


def _round_up(n, m):
    return ((n + m - 1) // m) * m


def _a2c_kernel(x_ref, w1_ref, b1_ref, wh_ref, bh_ref,
                out_ref, h_ref, *, act_size, compute_dtype):
    # ---- base: Linear + ReLU (MXU matmul, f32 accumulate) -------------------
    h = jnp.dot(x_ref[...], w1_ref[...],
                preferred_element_type=jnp.float32) + b1_ref[...]
    h_ref[...] = jnp.maximum(h, 0.0)

    # ---- fused heads: ONE matmul over the concatenated [mu | var | value] ---
    y = jnp.dot(h_ref[...].astype(compute_dtype), wh_ref[...],
                preferred_element_type=jnp.float32) + bh_ref[...]

    # Per-column activation without sub-lane slicing:
    #   cols [0, A)      -> tanh      (mu head)
    #   cols [A, 2A)     -> softplus  (var head, PyTorch beta=1, threshold=20)
    #   col  2A          -> identity  (value head)
    col = jax.lax.broadcasted_iota(jnp.int32, y.shape, dimension=1)
    tanh_y = jnp.tanh(y)
    sp_y = jnp.where(y > 20.0, y, jnp.log1p(jnp.exp(jnp.minimum(y, 20.0))))
    out = jnp.where(col < act_size, tanh_y,
                    jnp.where(col < 2 * act_size, sp_y, y))
    out_ref[...] = out.astype(out_ref.dtype)


@functools.partial(jax.jit, static_argnames=("block_m", "compute_dtype"))
def a2c_forward(x, params, *, block_m=512, compute_dtype=jnp.float32):
    """ModelA2C forward. Returns (mu, var, value)."""
    (w1, b1, wmu, bmu, wvar, bvar, wval, bval) = params
    B, obs = x.shape
    act_size = wmu.shape[1]
    n_out = 2 * act_size + 1  # fused head width: [mu | var | value]

    # ---- host-side (once per trace) head fusion -----------------------------
    w_heads = jnp.concatenate([wmu, wvar, wval], axis=1)      # (128, 2A+1)
    b_heads = jnp.concatenate([bmu, bvar, bval], axis=1)      # (1,   2A+1)

    # MXU operand dtype (accumulation / biases / activations stay f32).
    xc = x.astype(compute_dtype)
    w1c = w1.astype(compute_dtype)
    whc = w_heads.astype(compute_dtype)

    # ---- batch tiling: pad B to a multiple of the row tile ------------------
    tm = min(block_m, _round_up(B, 8))
    b_pad = _round_up(B, tm)
    if b_pad != B:
        xc = jnp.pad(xc, ((0, b_pad - B), (0, 0)))
    grid = (b_pad // tm,)

    kernel = functools.partial(_a2c_kernel,
                               act_size=act_size,
                               compute_dtype=compute_dtype)

    out = pl.pallas_call(
        kernel,
        out_shape=jax.ShapeDtypeStruct((b_pad, n_out), jnp.float32),
        grid_spec=pltpu.PrefetchScalarGridSpec(
            num_scalar_prefetch=0,
            grid=grid,
            in_specs=[
                # x: streamed per batch tile (double-buffered by BlockSpec)
                pl.BlockSpec((tm, obs), lambda i: (i, 0)),
                # weights / biases: VMEM-resident across the whole grid
                pl.BlockSpec((obs, HID_SIZE), lambda i: (0, 0)),
                pl.BlockSpec((1, HID_SIZE), lambda i: (0, 0)),
                pl.BlockSpec((HID_SIZE, n_out), lambda i: (0, 0)),
                pl.BlockSpec((1, n_out), lambda i: (0, 0)),
            ],
            # single fused narrow output block (one writeback DMA per step)
            out_specs=pl.BlockSpec((tm, n_out), lambda i: (i, 0)),
            # explicit VMEM staging for the (TM, 128) hidden activation
            scratch_shapes=[pltpu.VMEM((tm, HID_SIZE), jnp.float32)],
        ),
        compiler_params=pltpu.CompilerParams(
            dimension_semantics=("parallel",),  # 2x on v7x (2 TCs); no-op v5e/v6e
        ),
    )(xc, w1c, b1, whc, b_heads)

    out = out[:B]
    mu = out[:, :act_size]
    var = out[:, act_size:2 * act_size]
    val = out[:, 2 * act_size:]
    return mu, var, val


def init_params(key, obs_size, act_size):
    """PyTorch-style init: U(-1/sqrt(fan_in), 1/sqrt(fan_in)).
    Weights stored as (in, out), biases as (1, out)."""
    def linear(k, fan_in, fan_out):
        kw, kb = jax.random.split(k)
        bound = 1.0 / jnp.sqrt(fan_in)
        w = jax.random.uniform(kw, (fan_in, fan_out), jnp.float32, -bound, bound)
        b = jax.random.uniform(kb, (1, fan_out), jnp.float32, -bound, bound)
        return w, b

    k1, k2, k3, k4 = jax.random.split(key, 4)
    w1, b1 = linear(k1, obs_size, HID_SIZE)
    wmu, bmu = linear(k2, HID_SIZE, act_size)
    wvar, bvar = linear(k3, HID_SIZE, act_size)
    wval, bval = linear(k4, HID_SIZE, 1)
    return (w1, b1, wmu, bmu, wvar, bvar, wval, bval)


def reference_forward(x, params):
    """Pure-JAX reference for correctness checking."""
    (w1, b1, wmu, bmu, wvar, bvar, wval, bval) = params
    h = jnp.maximum(x @ w1 + b1, 0.0)
    mu = jnp.tanh(h @ wmu + bmu)
    z = h @ wvar + bvar
    var = jnp.where(z > 20.0, z, jnp.log1p(jnp.exp(jnp.minimum(z, 20.0))))
    val = h @ wval + bval
    return mu, var, val


if __name__ == "__main__":
    key = jax.random.PRNGKey(0)
    k_x, k_p, k_big = jax.random.split(key, 3)

    batch = 4
    obs_size = 8
    act_size = 4

    x = jax.random.normal(k_x, (batch, obs_size), dtype=jnp.float32)
    params = init_params(k_p, obs_size, act_size)

    # --- exact f32 path (primary correctness gate) ---------------------------
    mu, var, val = a2c_forward(x, params)
    jax.block_until_ready((mu, var, val))

    mu_ref, var_ref, val_ref = reference_forward(x, params)
    assert mu.shape == (batch, act_size)
    assert var.shape == (batch, act_size)
    assert val.shape == (batch, 1)
    assert jnp.allclose(mu, mu_ref, atol=1e-5, rtol=1e-5)
    assert jnp.allclose(var, var_ref, atol=1e-5, rtol=1e-5)
    assert jnp.allclose(val, val_ref, atol=1e-5, rtol=1e-5)

    # --- larger batch, bf16 MXU path (perf config), ragged B, multi-step grid -
    big_b = 300
    xb = jax.random.normal(k_big, (big_b, obs_size), dtype=jnp.float32)
    mu2, var2, val2 = a2c_forward(xb, params, block_m=256,
                                  compute_dtype=jnp.bfloat16)
    jax.block_until_ready((mu2, var2, val2))
    mu2_ref, var2_ref, val2_ref = reference_forward(xb, params)
    assert mu2.shape == (big_b, act_size)
    assert var2.shape == (big_b, act_size)
    assert val2.shape == (big_b, 1)
    assert jnp.allclose(mu2, mu2_ref, atol=1e-1, rtol=1e-1)
    assert jnp.allclose(var2, var2_ref, atol=1e-1, rtol=1e-1)
    assert jnp.allclose(val2, val2_ref, atol=1e-1, rtol=1e-1)

    print("KERNEL_OK")
</pallas_src>

<mosaic_0001>
module attributes {stable_mosaic.version = 11 : i64} {
  func.func @_a2c_kernel(%arg0: i32, %arg1: memref<8x8xf32, #tpu.memory_space<vmem>>, %arg2: memref<8x128xf32, #tpu.memory_space<vmem>>, %arg3: memref<1x128xf32, #tpu.memory_space<vmem>>, %arg4: memref<128x9xf32, #tpu.memory_space<vmem>>, %arg5: memref<1x9xf32, #tpu.memory_space<vmem>>, %arg6: memref<8x9xf32, #tpu.memory_space<vmem>>, %arg7: memref<8x128xf32, #tpu.memory_space<vmem>>) attributes {dimension_semantics = [#tpu.dimension_semantics<parallel>], iteration_bounds = array<i64: 1>, scalar_prefetch = 0 : i64, scratch_operands = 1 : i64, tpu.core_type = #tpu.core_type<tc>, window_params = [{transform_indices = @transform_0, window_bounds = array<i64: 8, 8>}, {pipeline_mode = #tpu.pipeline_mode<synchronous>, transform_indices = @transform_1, window_bounds = array<i64: 8, 128>}, {pipeline_mode = #tpu.pipeline_mode<synchronous>, transform_indices = @transform_2, window_bounds = array<i64: 1, 128>}, {pipeline_mode = #tpu.pipeline_mode<synchronous>, transform_indices = @transform_3, window_bounds = array<i64: 128, 9>}, {pipeline_mode = #tpu.pipeline_mode<synchronous>, transform_indices = @transform_4, window_bounds = array<i64: 1, 9>}, {transform_indices = @transform_5, window_bounds = array<i64: 8, 9>}]} {
    %c0 = arith.constant 0 : index
    %c0_0 = arith.constant 0 : index
    %0 = vector.load %arg1[%c0, %c0_0] : memref<8x8xf32, #tpu.memory_space<vmem>>, vector<8x8xf32>
    %c0_1 = arith.constant 0 : index
    %c0_2 = arith.constant 0 : index
    %1 = vector.load %arg2[%c0_1, %c0_2] : memref<8x128xf32, #tpu.memory_space<vmem>>, vector<8x128xf32>
    %cst = arith.constant dense<0.000000e+00> : vector<8x128xf32>
    %2 = tpu.matmul %0, %1, %cst {dimension_numbers = #tpu.dot_dimension_numbers<[1], [0], [0], [1], [0, 0, 1, 1], [], []>} : vector<8x8xf32>, vector<8x128xf32>, vector<8x128xf32> -> vector<8x128xf32>
    %c0_3 = arith.constant 0 : index
    %c0_4 = arith.constant 0 : index
    %3 = vector.load %arg3[%c0_3, %c0_4] : memref<1x128xf32, #tpu.memory_space<vmem>>, vector<1x128xf32>
    %4 = vector.broadcast %3 : vector<1x128xf32> to vector<8x128xf32>
    %5 = arith.addf %2, %4 : vector<8x128xf32>
    %cst_5 = arith.constant 0.000000e+00 : f32
    %6 = vector.broadcast %cst_5 : f32 to vector<8x128xf32>
    %7 = arith.maximumf %5, %6 : vector<8x128xf32>
    %c0_6 = arith.constant 0 : index
    %c0_7 = arith.constant 0 : index
    %8 = vector.load %arg7[%c0_6, %c0_7] : memref<8x128xf32, #tpu.memory_space<vmem>>, vector<8x128xf32>
    tpu.vector_store %arg7[%c0_6, %c0_7], %7 {strides = array<i32>} : memref<8x128xf32, #tpu.memory_space<vmem>>, vector<8x128xf32>,
    %c0_8 = arith.constant 0 : index
    %c0_9 = arith.constant 0 : index
    %9 = vector.load %arg7[%c0_8, %c0_9] : memref<8x128xf32, #tpu.memory_space<vmem>>, vector<8x128xf32>
    %c0_10 = arith.constant 0 : index
    %c0_11 = arith.constant 0 : index
    %10 = vector.load %arg4[%c0_10, %c0_11] : memref<128x9xf32, #tpu.memory_space<vmem>>, vector<128x9xf32>
    %cst_12 = arith.constant dense<0.000000e+00> : vector<8x9xf32>
    %11 = tpu.matmul %9, %10, %cst_12 {dimension_numbers = #tpu.dot_dimension_numbers<[1], [0], [0], [1], [0, 0, 1, 1], [], []>} : vector<8x128xf32>, vector<128x9xf32>, vector<8x9xf32> -> vector<8x9xf32>
    %c0_13 = arith.constant 0 : index
    %c0_14 = arith.constant 0 : index
    %12 = vector.load %arg5[%c0_13, %c0_14] : memref<1x9xf32, #tpu.memory_space<vmem>>, vector<1x9xf32>
    %13 = vector.broadcast %12 : vector<1x9xf32> to vector<8x9xf32>
    %14 = arith.addf %11, %13 : vector<8x9xf32>
    %15 = tpu.iota {dimensions = array<i32: 1>} : vector<8x9xi32>
    %16 = math.tanh %14 : vector<8x9xf32>
    %cst_15 = arith.constant 2.000000e+01 : f32
    %17 = vector.broadcast %cst_15 : f32 to vector<8x9xf32>
    %18 = arith.cmpf ogt, %14, %17 : vector<8x9xf32>
    %cst_16 = arith.constant 2.000000e+01 : f32
    %19 = vector.broadcast %cst_16 : f32 to vector<8x9xf32>
    %20 = arith.minimumf %14, %19 : vector<8x9xf32>
    %21 = math.exp %20 : vector<8x9xf32>
    %22 = math.log1p %21 : vector<8x9xf32>
    %23 = arith.select %18, %14, %22 : vector<8x9xi1>, vector<8x9xf32>
    %c4_i32 = arith.constant 4 : i32
    %24 = vector.broadcast %c4_i32 : i32 to vector<8x9xi32>
    %25 = arith.cmpi slt, %15, %24 : vector<8x9xi32>
    %c8_i32 = arith.constant 8 : i32
    %26 = vector.broadcast %c8_i32 : i32 to vector<8x9xi32>
    %27 = arith.cmpi slt, %15, %26 : vector<8x9xi32>
    %28 = arith.select %27, %23, %14 : vector<8x9xi1>, vector<8x9xf32>
    %29 = arith.select %25, %16, %28 : vector<8x9xi1>, vector<8x9xf32>
    %c0_17 = arith.constant 0 : index
    %c0_18 = arith.constant 0 : index
    %30 = vector.load %arg6[%c0_17, %c0_18] : memref<8x9xf32, #tpu.memory_space<vmem>>, vector<8x9xf32>
    tpu.vector_store %arg6[%c0_17, %c0_18], %29 {strides = array<i32>} : memref<8x9xf32, #tpu.memory_space<vmem>>, vector<8x9xf32>,
    return
  }
  func.func @transform_0(%arg0: i32) -> (i32, i32) {
    %c0_i32 = arith.constant 0 : i32
    %c0_i32_0 = arith.constant 0 : i32
    return %arg0, %c0_i32 : i32, i32
  }
  func.func @transform_1(%arg0: i32) -> (i32, i32) {
    %c0_i32 = arith.constant 0 : i32
    %c0_i32_0 = arith.constant 0 : i32
    %c0_i32_1 = arith.constant 0 : i32
    return %c0_i32, %c0_i32_0 : i32, i32
  }
  func.func @transform_2(%arg0: i32) -> (i32, i32) {
    %c0_i32 = arith.constant 0 : i32
    %c0_i32_0 = arith.constant 0 : i32
    %c0_i32_1 = arith.constant 0 : i32
    return %c0_i32, %c0_i32_0 : i32, i32
  }
  func.func @transform_3(%arg0: i32) -> (i32, i32) {
    %c0_i32 = arith.constant 0 : i32
    %c0_i32_0 = arith.constant 0 : i32
    %c0_i32_1 = arith.constant 0 : i32
    return %c0_i32, %c0_i32_0 : i32, i32
  }
  func.func @transform_4(%arg0: i32) -> (i32, i32) {
    %c0_i32 = arith.constant 0 : i32
    %c0_i32_0 = arith.constant 0 : i32
    %c0_i32_1 = arith.constant 0 : i32
    return %c0_i32, %c0_i32_0 : i32, i32
  }
  func.func @transform_5(%arg0: i32) -> (i32, i32) {
    %c0_i32 = arith.constant 0 : i32
    %c0_i32_0 = arith.constant 0 : i32
    return %arg0, %c0_i32 : i32, i32
  }
}

</mosaic_0001>

<llo_original>
// kernel: a2c_forward.1
$region0: #{a2c_forward.1}
  #allocation0 [shape = 'u32[]', space=smem, size = 0x4, offset = 0x4, fixed_abs, tag = 'smem constant byte address 0x4 - core index']
  #allocation1 [shape = 'u32[144,128]{1,0:T(1,128)}', space=vmem, size = 0x12000, scoped, tag = 'internal scratch']
  #allocation2 [shape = 'f32[8,128]{1,0:T(8,128)}', space=vmem, size = 0x1000, scoped, tag = 'scratch operand']
  %s0 = inlined_call_operand.vmem [shape: f32[8,8], index: 0, kind: input, shape index: {}]
  %s1 = inlined_call_operand.vmem [shape: f32[8,128], index: 1, kind: input, shape index: {}]
  %s2 = inlined_call_operand.vmem [shape: f32[1,128], index: 2, kind: input, shape index: {}]
  %s3 = inlined_call_operand.vmem [shape: f32[128,9], index: 3, kind: input, shape index: {}]
  %s4 = inlined_call_operand.vmem [shape: f32[1,9], index: 4, kind: input, shape index: {}]
  %s5 = inlined_call_operand.vmem [shape: f32[8,9], index: 5, kind: output, shape index: {}]
  %s6 = sld [smem:[#allocation0]]
  $region30: #{a2c_forward.1} parent=0
    _
  %s8 = ssub.s32 1, %s6
  %s9 = scalar_select 0, %s8, %s6
  // Predicated region
  $region2: #{a2c_forward.1} parent=0 // pred_check
    _
  $region3: #{a2c_forward.1} parent=0 // pred_check_branch
    %11 = sbr.rel (0) target = $region5
  $region4: #{a2c_forward.1} parent=0 // pred_region
    _
  $region5: #{a2c_forward.1} parent=0 // pred_fallthru
    _
  // Predicated region
  $region6: #{a2c_forward.1} parent=0 // pred_check
    _
  $region7: #{a2c_forward.1} parent=0 // pred_check_branch
    %13 = sbr.rel (0) target = $region9
  $region8: #{a2c_forward.1} parent=0 // pred_region
    _
  $region9: #{a2c_forward.1} parent=0 // pred_fallthru
    _
  // Predicated region
  $region10: #{a2c_forward.1} parent=0 // pred_check
    _
  $region11: #{a2c_forward.1} parent=0 // pred_check_branch
    %15 = sbr.rel (0) target = $region13
  $region12: #{a2c_forward.1} parent=0 // pred_region
    _
  $region13: #{a2c_forward.1} parent=0 // pred_fallthru
    _
  // Predicated region
  $region14: #{a2c_forward.1} parent=0 // pred_check
    _
  $region15: #{a2c_forward.1} parent=0 // pred_check_branch
    %17 = sbr.rel (0) target = $region17
  $region16: #{a2c_forward.1} parent=0 // pred_region
    _
  $region17: #{a2c_forward.1} parent=0 // pred_fallthru
    _
  // Predicated region
  $region18: #{a2c_forward.1} parent=0 // pred_check
    _
  $region19: #{a2c_forward.1} parent=0 // pred_check_branch
    %19 = sbr.rel (0) target = $region21
  $region20: #{a2c_forward.1} parent=0 // pred_region
    _
  $region21: #{a2c_forward.1} parent=0 // pred_fallthru
    _
  %v20 = vld [vmem:[%s0] sm:$0xff]
  %v21 = vld [vmem:[%s1] sm:$0xff]
  %v22 = vld [vmem:[%s2] sm:$0x1]
  %v24 = vlaneseq
  %v25 = vshrl.u32 %v24, 7
  %v26 = vsub.s32 0, %v25
  %v27 = vrot.slane %v22, %v26
  %vm29 = vcmask 64512
  %v31 = vsel %vm29, %v20, 0
  %33 = vmatprep.subr.mxu0 0.0
  %34 = vmatpush1.msra.mxu0 %v21
  %35 = vmatprep.subr.mxu0 0.0
  %36 = vmatpush1.msra.mxu0 0.0
  %37 = vmatprep.subr.mxu0 0.0
  %38 = vmatpush1.msra.mxu0 0.0
  %39 = vmatprep.subr.mxu0 0.0
  %40 = vmatpush1.msra.mxu0 0.0
  %41 = vmatprep.subr.mxu0 0.0
  %42 = vmatpush1.msra.mxu0 0.0
  %43 = vmatprep.subr.mxu0 0.0
  %44 = vmatpush1.msra.mxu0 0.0
  %45 = vmatprep.subr.mxu0 0.0
  %46 = vmatpush1.msra.mxu0 0.0
  %47 = vmatprep.subr.mxu0 0.0
  %48 = vmatpush1.msra.mxu0 0.0
  %49 = vmatprep.subr.mxu0 0.0
  %50 = vmatpush1.msra.mxu0 0.0
  %51 = vmatprep.subr.mxu0 0.0
  %52 = vmatpush1.msra.mxu0 0.0
  %53 = vmatprep.subr.mxu0 0.0
  %54 = vmatpush1.msra.mxu0 0.0
  %55 = vmatprep.subr.mxu0 0.0
  %56 = vmatpush1.msra.mxu0 0.0
  %57 = vmatprep.subr.mxu0 0.0
  %58 = vmatpush1.msra.mxu0 0.0
  %59 = vmatprep.subr.mxu0 0.0
  %60 = vmatpush1.msra.mxu0 0.0
  %61 = vmatprep.subr.mxu0 0.0
  %62 = vmatpush1.msra.mxu0 0.0
  %63 = vmatprep.subr.mxu0 0.0
  %64 = vmatpush1.msra.mxu0 0.0
  %65 = vmatprep.subr.mxu0 0.0
  %66 = vmatpush1.msra.mxu0 0.0
  %67 = vmatprep.subr.mxu0 0.0
  %68 = vmatpush1.msra.mxu0 0.0
  %69 = vmatprep.subr.mxu0 0.0
  %70 = vmatpush1.msra.mxu0 0.0
  %71 = vmatprep.subr.mxu0 0.0
  %72 = vmatpush1.msra.mxu0 0.0
  %73 = vmatprep.subr.mxu0 0.0
  %74 = vmatpush1.msra.mxu0 0.0
  %75 = vmatprep.subr.mxu0 0.0
  %76 = vmatpush1.msra.mxu0 0.0
  %77 = vmatprep.subr.mxu0 0.0
  %78 = vmatpush1.msra.mxu0 0.0
  %79 = vmatprep.subr.mxu0 0.0
  %80 = vmatpush1.msra.mxu0 0.0
  %81 = vmatprep.subr.mxu0 0.0
  %82 = vmatpush1.msra.mxu0 0.0
  %83 = vmatprep.subr.mxu0 0.0
  %84 = vmatpush1.msra.mxu0 0.0
  %85 = vmatprep.subr.mxu0 0.0
  %86 = vmatpush1.msra.mxu0 0.0
  %87 = vmatprep.subr.mxu0 0.0
  %88 = vmatpush1.msra.mxu0 0.0
  %89 = vmatprep.subr.mxu0 0.0
  %90 = vmatpush1.msra.mxu0 0.0
  %91 = vmatprep.subr.mxu0 0.0
  %92 = vmatpush1.msra.mxu0 0.0
  %93 = vmatprep.subr.mxu0 0.0
  %94 = vmatpush1.msra.mxu0 0.0
  %95 = vmatprep.subr.mxu0 0.0
  %96 = vmatpush1.msra.mxu0 0.0
  %97 = vmatprep.mubr.f32.mxu0 0.0
  %98 = vmatmul.mubr.f32.gmra.mrb[0].mxu0 %v31
  %v99 = vpop.f32.mrb[0].mxu0
  %v100 = vadd.f32 %v27, %v99
  %v101 = vpop.f32.mrb[0].mxu0
  %102 = vdwg.mxu0
  %v103 = vmax.f32 %v100, 0.0
  %104 = vst [vmem:[#allocation2] sm:$0xff] %v103
  %v105 = vld [vmem:[#allocation2] sm:$0xff]
  %v106 = vld [vmem:[%s3] sm:$0xff]
  %v107 = vld [vmem:[%s3 + $0x8] sm:$0xff]
  %v108 = vld [vmem:[%s3 + $0x10] sm:$0xff]
  %v109 = vld [vmem:[%s3 + $0x18] sm:$0xff]
  %v110 = vld [vmem:[%s3 + $0x20] sm:$0xff]
  %v111 = vld [vmem:[%s3 + $0x28] sm:$0xff]
  %v112 = vld [vmem:[%s3 + $0x30] sm:$0xff]
  %v113 = vld [vmem:[%s3 + $0x38] sm:$0xff]
  %v114 = vld [vmem:[%s3 + $0x40] sm:$0xff]
  %v115 = vld [vmem:[%s3 + $0x48] sm:$0xff]
  %v116 = vld [vmem:[%s3 + $0x50] sm:$0xff]
  %v117 = vld [vmem:[%s3 + $0x58] sm:$0xff]
  %v118 = vld [vmem:[%s3 + $0x60] sm:$0xff]
  %v119 = vld [vmem:[%s3 + $0x68] sm:$0xff]
  %v120 = vld [vmem:[%s3 + $0x70] sm:$0xff]
  %v121 = vld [vmem:[%s3 + $0x78] sm:$0xff]
  %v122 = vld [vmem:[%s4] sm:$0x1]
  %v124 = vlaneseq
  %v125 = vshrl.u32 %v124, 7
  %v126 = vsub.s32 0, %v125
  %v127 = vrot.slane %v122, %v126
  %129 = vmatprep.subr.mxu0 0.0
  %130 = vmatpush1.msra.mxu0 %v106
  %131 = vmatprep.subr.mxu0 0.0
  %132 = vmatpush1.msra.mxu0 %v107
  %133 = vmatprep.subr.mxu0 0.0
  %134 = vmatpush1.msra.mxu0 %v108
  %135 = vmatprep.subr.mxu0 0.0
  %136 = vmatpush1.msra.mxu0 %v109
  %137 = vmatprep.subr.mxu0 0.0
  %138 = vmatpush1.msra.mxu0 %v110
  %139 = vmatprep.subr.mxu0 0.0
  %140 = vmatpush1.msra.mxu0 %v111
  %141 = vmatprep.subr.mxu0 0.0
  %142 = vmatpush1.msra.mxu0 %v112
  %143 = vmatprep.subr.mxu0 0.0
  %144 = vmatpush1.msra.mxu0 %v113
  %145 = vmatprep.subr.mxu0 0.0
  %146 = vmatpush1.msra.mxu0 %v114
  %147 = vmatprep.subr.mxu0 0.0
  %148 = vmatpush1.msra.mxu0 %v115
  %149 = vmatprep.subr.mxu0 0.0
  %150 = vmatpush1.msra.mxu0 %v116
  %151 = vmatprep.subr.mxu0 0.0
  %152 = vmatpush1.msra.mxu0 %v117
  %153 = vmatprep.subr.mxu0 0.0
  %154 = vmatpush1.msra.mxu0 %v118
  %155 = vmatprep.subr.mxu0 0.0
  %156 = vmatpush1.msra.mxu0 %v119
  %157 = vmatprep.subr.mxu0 0.0
  %158 = vmatpush1.msra.mxu0 %v120
  %159 = vmatprep.subr.mxu0 0.0
  %160 = vmatpush1.msra.mxu0 %v121
  %161 = vmatprep.subr.mxu0 0.0
  %162 = vmatpush1.msra.mxu0 0.0
  %163 = vmatprep.subr.mxu0 0.0
  %164 = vmatpush1.msra.mxu0 0.0
  %165 = vmatprep.subr.mxu0 0.0
  %166 = vmatpush1.msra.mxu0 0.0
  %167 = vmatprep.subr.mxu0 0.0
  %168 = vmatpush1.msra.mxu0 0.0
  %169 = vmatprep.subr.mxu0 0.0
  %170 = vmatpush1.msra.mxu0 0.0
  %171 = vmatprep.subr.mxu0 0.0
  %172 = vmatpush1.msra.mxu0 0.0
  %173 = vmatprep.subr.mxu0 0.0
  %174 = vmatpush1.msra.mxu0 0.0
  %175 = vmatprep.subr.mxu0 0.0
  %176 = vmatpush1.msra.mxu0 0.0
  %177 = vmatprep.subr.mxu0 0.0
  %178 = vmatpush1.msra.mxu0 0.0
  %179 = vmatprep.subr.mxu0 0.0
  %180 = vmatpush1.msra.mxu0 0.0
  %181 = vmatprep.subr.mxu0 0.0
  %182 = vmatpush1.msra.mxu0 0.0
  %183 = vmatprep.subr.mxu0 0.0
  %184 = vmatpush1.msra.mxu0 0.0
  %185 = vmatprep.subr.mxu0 0.0
  %186 = vmatpush1.msra.mxu0 0.0
  %187 = vmatprep.subr.mxu0 0.0
  %188 = vmatpush1.msra.mxu0 0.0
  %189 = vmatprep.subr.mxu0 0.0
  %190 = vmatpush1.msra.mxu0 0.0
  %191 = vmatprep.subr.mxu0 0.0
  %192 = vmatpush1.msra.mxu0 0.0
  %193 = vmatprep.mubr.f32.mxu0 0.0
  %194 = vmatmul.mubr.f32.gmra.mrb[0].mxu0 %v105
  %v195 = vpop.f32.mrb[0].mxu0
  %v196 = vadd.f32 %v127, %v195
  %v197 = vpop.f32.mrb[0].mxu0
  %198 = vdwg.mxu0
  %v199 = vlaneseq
  %v200 = vand.u32 %v199, 127
  %v201 = vtanh.pop %v196
  %vm202 = vcmp.gt.f32.partialorder %v196, 20.0
  %v203 = vmin.f32 %v196, 20.0
  %v204 = vmul.f32 %v203, 1.442695
  %v205 = vpow.pop %v204
  %v206 = vadd.f32 %v205, 1.0
  %v207 = vlog2.pop %v206
  %v208 = vmul.f32 %v207, 0.6931472
  %v209 = vmul.f32 -0.5, %v205
  %v210 = vadd.f32 %v209, 1.0
  %v211 = vmul.f32 %v210, %v205
  %v212 = vand.u32 2147483647, %v205
  %vm213 = vcmp.lt.f32.partialorder %v212, 0.0004427343
  %v214 = vsel %vm213, %v211, %v208
  %v215 = vsel %vm202, %v196, %v214
  %vm216 = vcmp.lt.s32.totalorder %v200, 4
  %vm217 = vcmp.lt.s32.totalorder %v200, 8
  %v218 = vsel %vm217, %v215, %v196
  %v219 = vsel %vm216, %v201, %v218
  %vm220 = vcmask 72704
  %221 = vst.msk [vmem:[%s5] sm:$0xff] %vm220, %v219
  // Predicated region
  $region22: #{a2c_forward.1} parent=0 // pred_check
    _
  $region23: #{a2c_forward.1} parent=0 // pred_check_branch
    %223 = sbr.rel (0) target = $region25
  $region24: #{a2c_forward.1} parent=0 // pred_region
    _
  $region25: #{a2c_forward.1} parent=0 // pred_fallthru
    _
  // Predicated region
  $region26: #{a2c_forward.1} parent=0 // pred_check
    _
  $region27: #{a2c_forward.1} parent=0 // pred_check_branch
    %225 = sbr.rel (0) target = $region29
  $region28: #{a2c_forward.1} parent=0 // pred_region
    _
  $region29: #{a2c_forward.1} parent=0 // pred_fallthru
    _

</llo_original>
